<compile_context>
chip_gen: v7x
topology: tpu7x:2x2x1
jax: 0.10.0
libtpu: 0.0.40
codegen_flags: <defaults>
</compile_context>

<pallas_src>
import functools

import jax
import jax.numpy as jnp
from jax.experimental import pallas as pl
from jax.experimental.pallas import tpu as pltpu


def _round_up(x, m):
    return (x + m - 1) // m * m


def _gru_kernel(x_ref, h_ref, wx_ref, wh_ref, b_ref, out_ref, *, block_n):
    """One (batch tile, hidden-column tile) of the GRU cell.

    x_ref  : [tm, Kp]            compute dtype (bf16)
    h_ref  : [tm, Sp]            state dtype (f32), full hidden (matmul K dim)
    wx_ref : [3, Kp, block_n]    compute dtype (per-gate input weights)
    wh_ref : [3, Sp, block_n]    compute dtype (per-gate recurrent weights)
    b_ref  : [3, 1, block_n]     f32 (update_bias already folded into gate 2)
    out_ref: [tm, block_n]       state dtype
    """
    j = pl.program_id(1)

    x = x_ref[...]                              # [tm, Kp]
    h_full = h_ref[...]                         # [tm, Sp], state dtype
    h_mm = h_full.astype(wh_ref.dtype)          # matmul operand (bf16)

    def gate(g):
        acc = jnp.dot(x, wx_ref[g], preferred_element_type=jnp.float32)
        acc = acc + jnp.dot(h_mm, wh_ref[g], preferred_element_type=jnp.float32)
        return acc + b_ref[g]                   # [tm, block_n] f32

    reset = jax.nn.sigmoid(gate(0))
    cand = jnp.tanh(reset * gate(1))
    update = jax.nn.sigmoid(gate(2))            # update_bias pre-folded

    # 128-aligned dynamic slice of the state columns owned by this tile.
    col = pl.multiple_of(j * block_n, 128)
    h_cols = h_ref[:, pl.ds(col, block_n)].astype(jnp.float32)

    out_ref[...] = (update * cand + (1.0 - update) * h_cols).astype(out_ref.dtype)


def gru_cell(inputs, state, weight, bias, *, update_bias=-1.0,
             compute_dtype=jnp.bfloat16, block_b=128, block_n=None,
             weight_resident_bytes=16 * 1024 * 1024):
    """GRU cell forward.

    inputs [B, inp_size], state [B, size],
    weight [inp_size + size, 3*size]  (PyTorch nn.Linear weight transposed),
    bias   [3*size].
    """
    B, inp_size = inputs.shape
    B2, size = state.shape
    assert B == B2
    assert weight.shape == (inp_size + size, 3 * size)
    assert bias.shape == (3 * size,)

    # Lane-aligned padded sizes and tile shapes.
    Sp = _round_up(size, 128)
    Kp = _round_up(inp_size, 128)
    tm = min(block_b, _round_up(B, 8))
    Bp = _round_up(B, tm)

    # Hidden-column tile: keep the whole weight slab resident when it fits in
    # a conservative VMEM budget, otherwise stream 128/256/512-wide column
    # tiles of each gate per grid step.
    itemsize = jnp.dtype(compute_dtype).itemsize
    if block_n is None:
        w_bytes = 3 * (Kp + Sp) * Sp * itemsize
        if w_bytes <= weight_resident_bytes:
            block_n = Sp
        else:
            block_n = 512 if Sp % 512 == 0 else (256 if Sp % 256 == 0 else 128)
    assert Sp % block_n == 0 and block_n % 128 == 0
    n_i = Bp // tm
    n_j = Sp // block_n

    # Pad activations. x is only used by the matmul -> cast to compute dtype in
    # the wrapper (halves its DMA). h is also needed at state precision for the
    # blend, so it stays in the state dtype and is cast in-kernel for its matmul.
    x_pad = jnp.zeros((Bp, Kp), compute_dtype).at[:B, :inp_size].set(
        inputs.astype(compute_dtype))
    h_pad = jnp.zeros((Bp, Sp), state.dtype).at[:B, :size].set(state)

    # Split the weight at the fan-in boundary and per gate; pad each gate slab
    # so every gate starts at a 128-aligned column. Layout: [gate, fan_in, Sp].
    w_x3 = weight[:inp_size].reshape(inp_size, 3, size).transpose(1, 0, 2)
    w_h3 = weight[inp_size:].reshape(size, 3, size).transpose(1, 0, 2)
    b3 = bias.reshape(3, size)

    wx_p = jnp.zeros((3, Kp, Sp), compute_dtype).at[:, :inp_size, :size].set(
        w_x3.astype(compute_dtype))
    wh_p = jnp.zeros((3, Sp, Sp), compute_dtype).at[:, :size, :size].set(
        w_h3.astype(compute_dtype))
    b_p = jnp.zeros((3, 1, Sp), jnp.float32).at[:, 0, :size].set(
        b3.astype(jnp.float32))
    # Constant-fold update_bias into the update-gate bias.
    b_p = b_p.at[2, 0, :size].add(update_bias)

    kernel = functools.partial(_gru_kernel, block_n=block_n)

    out_pad = pl.pallas_call(
        kernel,
        out_shape=jax.ShapeDtypeStruct((Bp, Sp), state.dtype),
        grid=(n_i, n_j),
        in_specs=[
            pl.BlockSpec((tm, Kp), lambda i, j: (i, 0)),          # x tile
            pl.BlockSpec((tm, Sp), lambda i, j: (i, 0)),          # h tile (full K)
            pl.BlockSpec((3, Kp, block_n), lambda i, j: (0, 0, j)),  # Wx cols
            pl.BlockSpec((3, Sp, block_n), lambda i, j: (0, 0, j)),  # Wh cols
            pl.BlockSpec((3, 1, block_n), lambda i, j: (0, 0, j)),   # bias cols
        ],
        out_specs=pl.BlockSpec((tm, block_n), lambda i, j: (i, j)),
        input_output_aliases={1: 0},  # donate padded state buffer to output
        compiler_params=pltpu.CompilerParams(
            dimension_semantics=("parallel", "arbitrary"),
            vmem_limit_bytes=64 * 1024 * 1024,
        ),
    )(x_pad, h_pad, wx_p, wh_p, b_p)

    return out_pad[:B, :size]


def gru_cell_ref(inputs, state, weight, bias, *, update_bias=-1.0,
                 compute_dtype=None):
    """Pure-JAX reference mirroring the PyTorch forward.

    compute_dtype=None      -> full f32 matmul (the module's semantics).
    compute_dtype=bfloat16  -> matches the kernel's bf16-matmul / f32-accum path.
    """
    size = state.shape[-1]
    xh = jnp.concatenate([inputs, state], -1)
    if compute_dtype is None:
        parts = xh @ weight + bias
    else:
        parts = jnp.dot(xh.astype(compute_dtype), weight.astype(compute_dtype),
                        preferred_element_type=jnp.float32) + bias
    reset = jax.nn.sigmoid(parts[:, :size])
    cand = jnp.tanh(reset * parts[:, size:2 * size])
    update = jax.nn.sigmoid(parts[:, 2 * size:] + update_bias)
    return update * cand + (1.0 - update) * state


if __name__ == "__main__":
    def make_case(key, batch, inp_size, size):
        k_x, k_h, k_w, k_b = jax.random.split(key, 4)
        x = jax.random.normal(k_x, (batch, inp_size), dtype=jnp.float32)
        h = jax.random.normal(k_h, (batch, size), dtype=jnp.float32)
        fan_in = inp_size + size
        bound = 1.0 / (fan_in ** 0.5)
        w = jax.random.uniform(k_w, (fan_in, 3 * size), dtype=jnp.float32,
                               minval=-bound, maxval=bound)
        b = jax.random.uniform(k_b, (3 * size,), dtype=jnp.float32,
                               minval=-bound, maxval=bound)
        return x, h, w, b

    key = jax.random.PRNGKey(0)
    k1, k2 = jax.random.split(key)

    # Case 1: small shapes consistent with the module (single tile, grid 1x1).
    x1, h1, w1, b1 = make_case(k1, batch=8, inp_size=16, size=32)
    gru1 = jax.jit(functools.partial(gru_cell, update_bias=-1.0))
    out1 = jax.block_until_ready(gru1(x1, h1, w1, b1))
    assert out1.shape == (8, 32)
    ref1_bf16 = gru_cell_ref(x1, h1, w1, b1, compute_dtype=jnp.bfloat16)
    ref1_f32 = gru_cell_ref(x1, h1, w1, b1)
    assert jnp.allclose(out1, ref1_bf16, atol=1e-4, rtol=1e-4), \
        "case1: mismatch vs bf16-matmul reference"
    assert jnp.allclose(out1, ref1_f32, atol=2e-2, rtol=2e-2), \
        "case1: mismatch vs f32 reference"

    # Case 2: exercises the batch grid and the hidden-column tiling path
    # (grid 3x2), including state-buffer aliasing and resident h across j.
    x2, h2, w2, b2 = make_case(k2, batch=24, inp_size=200, size=256)
    gru2 = jax.jit(functools.partial(gru_cell, update_bias=-1.0,
                                     block_b=8, block_n=128))
    out2 = jax.block_until_ready(gru2(x2, h2, w2, b2))
    assert out2.shape == (24, 256)
    ref2_bf16 = gru_cell_ref(x2, h2, w2, b2, compute_dtype=jnp.bfloat16)
    ref2_f32 = gru_cell_ref(x2, h2, w2, b2)
    assert jnp.allclose(out2, ref2_bf16, atol=1e-4, rtol=1e-4), \
        "case2: mismatch vs bf16-matmul reference"
    assert jnp.allclose(out2, ref2_f32, atol=2e-2, rtol=2e-2), \
        "case2: mismatch vs f32 reference"

    print("KERNEL_OK")
</pallas_src>

<mosaic_0001>
module attributes {stable_mosaic.version = 11 : i64} {
  func.func @_gru_kernel(%arg0: i32, %arg1: i32, %arg2: memref<8x128xbf16, #tpu.memory_space<vmem>>, %arg3: memref<8x128xf32, #tpu.memory_space<vmem>>, %arg4: memref<3x128x128xbf16, #tpu.memory_space<vmem>>, %arg5: memref<3x128x128xbf16, #tpu.memory_space<vmem>>, %arg6: memref<3x1x128xf32, #tpu.memory_space<vmem>>, %arg7: memref<8x128xf32, #tpu.memory_space<vmem>>) attributes {dimension_semantics = [#tpu.dimension_semantics<parallel>, #tpu.dimension_semantics<arbitrary>], iteration_bounds = array<i64: 1, 1>, scalar_prefetch = 0 : i64, scratch_operands = 0 : i64, tpu.core_type = #tpu.core_type<tc>, window_params = [{transform_indices = @transform_0, window_bounds = array<i64: 8, 128>}, {transform_indices = @transform_1, window_bounds = array<i64: 8, 128>}, {transform_indices = @transform_2, window_bounds = array<i64: 3, 128, 128>}, {transform_indices = @transform_3, window_bounds = array<i64: 3, 128, 128>}, {transform_indices = @transform_4, window_bounds = array<i64: 3, 1, 128>}, {transform_indices = @transform_5, window_bounds = array<i64: 8, 128>}]} {
    %c0 = arith.constant 0 : index
    %c0_0 = arith.constant 0 : index
    %0 = vector.load %arg2[%c0, %c0_0] : memref<8x128xbf16, #tpu.memory_space<vmem>>, vector<8x128xbf16>
    %c0_1 = arith.constant 0 : index
    %c0_2 = arith.constant 0 : index
    %1 = vector.load %arg3[%c0_1, %c0_2] : memref<8x128xf32, #tpu.memory_space<vmem>>, vector<8x128xf32>
    %2 = arith.truncf %1 : vector<8x128xf32> to vector<8x128xbf16>
    %c0_3 = arith.constant 0 : index
    %c0_4 = arith.constant 0 : index
    %c0_5 = arith.constant 0 : index
    %3 = vector.load %arg4[%c0_3, %c0_4, %c0_5] : memref<3x128x128xbf16, #tpu.memory_space<vmem>>, vector<1x128x128xbf16>
    %4 = vector.shape_cast %3 : vector<1x128x128xbf16> to vector<128x128xbf16>
    %cst = arith.constant dense<0.000000e+00> : vector<8x128xf32>
    %5 = tpu.matmul %0, %4, %cst {dimension_numbers = #tpu.dot_dimension_numbers<[1], [0], [0], [1], [0, 0, 1, 1], [], []>} : vector<8x128xbf16>, vector<128x128xbf16>, vector<8x128xf32> -> vector<8x128xf32>
    %c0_6 = arith.constant 0 : index
    %c0_7 = arith.constant 0 : index
    %c0_8 = arith.constant 0 : index
    %6 = vector.load %arg5[%c0_6, %c0_7, %c0_8] : memref<3x128x128xbf16, #tpu.memory_space<vmem>>, vector<1x128x128xbf16>
    %7 = vector.shape_cast %6 : vector<1x128x128xbf16> to vector<128x128xbf16>
    %cst_9 = arith.constant dense<0.000000e+00> : vector<8x128xf32>
    %8 = tpu.matmul %2, %7, %cst_9 {dimension_numbers = #tpu.dot_dimension_numbers<[1], [0], [0], [1], [0, 0, 1, 1], [], []>} : vector<8x128xbf16>, vector<128x128xbf16>, vector<8x128xf32> -> vector<8x128xf32>
    %9 = arith.addf %5, %8 : vector<8x128xf32>
    %c0_10 = arith.constant 0 : index
    %c0_11 = arith.constant 0 : index
    %c0_12 = arith.constant 0 : index
    %10 = vector.load %arg6[%c0_10, %c0_11, %c0_12] : memref<3x1x128xf32, #tpu.memory_space<vmem>>, vector<1x1x128xf32>
    %11 = vector.shape_cast %10 : vector<1x1x128xf32> to vector<1x128xf32>
    %12 = vector.broadcast %11 : vector<1x128xf32> to vector<8x128xf32>
    %13 = arith.addf %9, %12 : vector<8x128xf32>
    %14 = arith.negf %13 : vector<8x128xf32>
    %15 = math.exp %14 : vector<8x128xf32>
    %cst_13 = arith.constant 1.000000e+00 : f32
    %16 = vector.broadcast %cst_13 : f32 to vector<8x128xf32>
    %17 = arith.addf %16, %15 : vector<8x128xf32>
    %18 = arith.divf %16, %17 : vector<8x128xf32>
    %c1 = arith.constant 1 : index
    %c0_14 = arith.constant 0 : index
    %c0_15 = arith.constant 0 : index
    %19 = vector.load %arg4[%c1, %c0_14, %c0_15] : memref<3x128x128xbf16, #tpu.memory_space<vmem>>, vector<1x128x128xbf16>
    %20 = vector.shape_cast %19 : vector<1x128x128xbf16> to vector<128x128xbf16>
    %cst_16 = arith.constant dense<0.000000e+00> : vector<8x128xf32>
    %21 = tpu.matmul %0, %20, %cst_16 {dimension_numbers = #tpu.dot_dimension_numbers<[1], [0], [0], [1], [0, 0, 1, 1], [], []>} : vector<8x128xbf16>, vector<128x128xbf16>, vector<8x128xf32> -> vector<8x128xf32>
    %c1_17 = arith.constant 1 : index
    %c0_18 = arith.constant 0 : index
    %c0_19 = arith.constant 0 : index
    %22 = vector.load %arg5[%c1_17, %c0_18, %c0_19] : memref<3x128x128xbf16, #tpu.memory_space<vmem>>, vector<1x128x128xbf16>
    %23 = vector.shape_cast %22 : vector<1x128x128xbf16> to vector<128x128xbf16>
    %cst_20 = arith.constant dense<0.000000e+00> : vector<8x128xf32>
    %24 = tpu.matmul %2, %23, %cst_20 {dimension_numbers = #tpu.dot_dimension_numbers<[1], [0], [0], [1], [0, 0, 1, 1], [], []>} : vector<8x128xbf16>, vector<128x128xbf16>, vector<8x128xf32> -> vector<8x128xf32>
    %25 = arith.addf %21, %24 : vector<8x128xf32>
    %c1_21 = arith.constant 1 : index
    %c0_22 = arith.constant 0 : index
    %c0_23 = arith.constant 0 : index
    %26 = vector.load %arg6[%c1_21, %c0_22, %c0_23] : memref<3x1x128xf32, #tpu.memory_space<vmem>>, vector<1x1x128xf32>
    %27 = vector.shape_cast %26 : vector<1x1x128xf32> to vector<1x128xf32>
    %28 = vector.broadcast %27 : vector<1x128xf32> to vector<8x128xf32>
    %29 = arith.addf %25, %28 : vector<8x128xf32>
    %30 = arith.mulf %18, %29 : vector<8x128xf32>
    %31 = math.tanh %30 : vector<8x128xf32>
    %c2 = arith.constant 2 : index
    %c0_24 = arith.constant 0 : index
    %c0_25 = arith.constant 0 : index
    %32 = vector.load %arg4[%c2, %c0_24, %c0_25] : memref<3x128x128xbf16, #tpu.memory_space<vmem>>, vector<1x128x128xbf16>
    %33 = vector.shape_cast %32 : vector<1x128x128xbf16> to vector<128x128xbf16>
    %cst_26 = arith.constant dense<0.000000e+00> : vector<8x128xf32>
    %34 = tpu.matmul %0, %33, %cst_26 {dimension_numbers = #tpu.dot_dimension_numbers<[1], [0], [0], [1], [0, 0, 1, 1], [], []>} : vector<8x128xbf16>, vector<128x128xbf16>, vector<8x128xf32> -> vector<8x128xf32>
    %c2_27 = arith.constant 2 : index
    %c0_28 = arith.constant 0 : index
    %c0_29 = arith.constant 0 : index
    %35 = vector.load %arg5[%c2_27, %c0_28, %c0_29] : memref<3x128x128xbf16, #tpu.memory_space<vmem>>, vector<1x128x128xbf16>
    %36 = vector.shape_cast %35 : vector<1x128x128xbf16> to vector<128x128xbf16>
    %cst_30 = arith.constant dense<0.000000e+00> : vector<8x128xf32>
    %37 = tpu.matmul %2, %36, %cst_30 {dimension_numbers = #tpu.dot_dimension_numbers<[1], [0], [0], [1], [0, 0, 1, 1], [], []>} : vector<8x128xbf16>, vector<128x128xbf16>, vector<8x128xf32> -> vector<8x128xf32>
    %38 = arith.addf %34, %37 : vector<8x128xf32>
    %c2_31 = arith.constant 2 : index
    %c0_32 = arith.constant 0 : index
    %c0_33 = arith.constant 0 : index
    %39 = vector.load %arg6[%c2_31, %c0_32, %c0_33] : memref<3x1x128xf32, #tpu.memory_space<vmem>>, vector<1x1x128xf32>
    %40 = vector.shape_cast %39 : vector<1x1x128xf32> to vector<1x128xf32>
    %41 = vector.broadcast %40 : vector<1x128xf32> to vector<8x128xf32>
    %42 = arith.addf %38, %41 : vector<8x128xf32>
    %43 = arith.negf %42 : vector<8x128xf32>
    %44 = math.exp %43 : vector<8x128xf32>
    %cst_34 = arith.constant 1.000000e+00 : f32
    %45 = vector.broadcast %cst_34 : f32 to vector<8x128xf32>
    %46 = arith.addf %45, %44 : vector<8x128xf32>
    %47 = arith.divf %45, %46 : vector<8x128xf32>
    %c128_i32 = arith.constant 128 : i32
    %48 = arith.muli %arg1, %c128_i32 : i32
    %49 = tpu.assume_multiple %48, 128 : i32
    %c0_35 = arith.constant 0 : index
    %50 = arith.index_cast %49 : i32 to index
    %51 = vector.load %arg3[%c0_35, %50] : memref<8x128xf32, #tpu.memory_space<vmem>>, vector<8x128xf32>
    %52 = arith.mulf %47, %31 : vector<8x128xf32>
    %cst_36 = arith.constant 1.000000e+00 : f32
    %53 = vector.broadcast %cst_36 : f32 to vector<8x128xf32>
    %54 = arith.subf %53, %47 : vector<8x128xf32>
    %55 = arith.mulf %54, %51 : vector<8x128xf32>
    %56 = arith.addf %52, %55 : vector<8x128xf32>
    %c0_37 = arith.constant 0 : index
    %c0_38 = arith.constant 0 : index
    %57 = vector.load %arg7[%c0_37, %c0_38] : memref<8x128xf32, #tpu.memory_space<vmem>>, vector<8x128xf32>
    tpu.vector_store %arg7[%c0_37, %c0_38], %56 {strides = array<i32>} : memref<8x128xf32, #tpu.memory_space<vmem>>, vector<8x128xf32>,
    return
  }
  func.func @transform_0(%arg0: i32, %arg1: i32) -> (i32, i32) {
    %c0_i32 = arith.constant 0 : i32
    %c0_i32_0 = arith.constant 0 : i32
    return %arg0, %c0_i32 : i32, i32
  }
  func.func @transform_1(%arg0: i32, %arg1: i32) -> (i32, i32) {
    %c0_i32 = arith.constant 0 : i32
    %c0_i32_0 = arith.constant 0 : i32
    return %arg0, %c0_i32 : i32, i32
  }
  func.func @transform_2(%arg0: i32, %arg1: i32) -> (i32, i32, i32) {
    %c0_i32 = arith.constant 0 : i32
    %c0_i32_0 = arith.constant 0 : i32
    %c0_i32_1 = arith.constant 0 : i32
    return %c0_i32, %c0_i32_0, %arg1 : i32, i32, i32
  }
  func.func @transform_3(%arg0: i32, %arg1: i32) -> (i32, i32, i32) {
    %c0_i32 = arith.constant 0 : i32
    %c0_i32_0 = arith.constant 0 : i32
    %c0_i32_1 = arith.constant 0 : i32
    return %c0_i32, %c0_i32_0, %arg1 : i32, i32, i32
  }
  func.func @transform_4(%arg0: i32, %arg1: i32) -> (i32, i32, i32) {
    %c0_i32 = arith.constant 0 : i32
    %c0_i32_0 = arith.constant 0 : i32
    %c0_i32_1 = arith.constant 0 : i32
    return %c0_i32, %c0_i32_0, %arg1 : i32, i32, i32
  }
  func.func @transform_5(%arg0: i32, %arg1: i32) -> (i32, i32) {
    %c0_i32 = arith.constant 0 : i32
    return %arg0, %arg1 : i32, i32
  }
}

</mosaic_0001>

<llo_original>
// kernel: gru_cell.1
$region0: #{gru_cell.1}
  #allocation0 [shape = 'u32[]', space=smem, size = 0x4, offset = 0x4, fixed_abs, tag = 'smem constant byte address 0x4 - core index']
  #allocation1 [shape = 'u32[144,128]{1,0:T(1,128)}', space=vmem, size = 0x12000, scoped, tag = 'internal scratch']
  %s0 = inlined_call_operand.hbm [shape: bf16[8,128], index: 0, kind: input, shape index: {}]
  %s1 = inlined_call_operand.hbm [shape: f32[8,128], index: 1, kind: input, shape index: {}, may-alias: {1,5}]
  %s2 = inlined_call_operand.hbm [shape: bf16[3,128,128], index: 2, kind: input, shape index: {}]
  %s3 = inlined_call_operand.hbm [shape: bf16[3,128,128], index: 3, kind: input, shape index: {}]
  %s4 = inlined_call_operand.hbm [shape: f32[3,1,128], index: 4, kind: input, shape index: {}]
  %s5 = inlined_call_operand.hbm [shape: f32[8,128], index: 5, kind: output, shape index: {}, may-alias: {1,5}]
  %s6 = sld [smem:[#allocation0]]
  $region50: #{gru_cell.1} parent=0
    _
  %s8 = ssub.s32 1, %s6
  %s9 = scalar_select 0, %s8, %s6
  $region1: #{gru_cell.1} parent=0
    #allocation2 [shape = 'u8[2048]{0}', space=vmem, size = 0x800, scoped, tag = 'input window, operand 0, single buffered']
    #allocation3 [shape = 's32[1]{0}', space=sflag, size = 0x4, scoped, tag = 'scoped memory for gru_cell.1']
    #allocation4 [shape = 's32[1]{0}', space=sflag, size = 0x4, scoped, tag = 'scoped memory for gru_cell.1']
    #allocation5 [shape = 'u8[4096]{0}', space=vmem, size = 0x1000, scoped, tag = 'input window, operand 1, single buffered']
    #allocation6 [shape = 's32[1]{0}', space=sflag, size = 0x4, scoped, tag = 'scoped memory for gru_cell.1']
    #allocation7 [shape = 'u8[98304]{0}', space=vmem, size = 0x18000, scoped, tag = 'input window, operand 2, single buffered']
    #allocation8 [shape = 'u8[98304]{0}', space=vmem, size = 0x18000, scoped, tag = 'input window, operand 3, single buffered']
    #allocation9 [shape = 's32[1]{0}', space=sflag, size = 0x4, scoped, tag = 'scoped memory for gru_cell.1']
    #allocation10 [shape = 'u8[1536]{0}', space=vmem, size = 0x800, scoped, tag = 'input window, operand 4, single buffered']
    #allocation11 [shape = 'u8[4096]{0}', space=vmem, size = 0x1000, scoped, tag = 'output window, operand 0, single buffered']
    %10 = vsyncpa [#allocation3], 0
    %11 = vsyncpa [#allocation6], 0
    %12 = vsyncpa [#allocation9], 0
    %13 = vsyncpa [#allocation4], 0
    // Predicated region
    $region2: #{gru_cell.1} parent=1 // pred_check
      _
    $region3: #{gru_cell.1} parent=1 // pred_check_branch
      %15 = sbr.rel (0) target = $region5
    $region4: #{gru_cell.1} parent=1 // pred_region
      %s17 = ssub.s32 64, 64
      %18 = vsyncadd [#allocation3], %s17
      %s20 = sshll.u32 [#allocation2], 4
      %s21 = int_to_ptr.vmem [resolvable:$true] %s20
      %23 = dma.hbm_to_vmem [thread:$0]  %s0, 64, %s21, [#allocation3]
    $region5: #{gru_cell.1} parent=1 // pred_fallthru
      _
    // Predicated region
    $region6: #{gru_cell.1} parent=1 // pred_check
      _
    $region7: #{gru_cell.1} parent=1 // pred_check_branch
      %25 = sbr.rel (0) target = $region9
    $region8: #{gru_cell.1} parent=1 // pred_region
      %s27 = ssub.s32 128, 128
      %28 = vsyncadd [#allocation6], %s27
      %s30 = sshll.u32 [#allocation5], 4
      %s31 = int_to_ptr.vmem [resolvable:$true] %s30
      %33 = dma.hbm_to_vmem [thread:$0]  %s1, 128, %s31, [#allocation6]
    $region9: #{gru_cell.1} parent=1 // pred_fallthru
      _
    // Predicated region
    $region10: #{gru_cell.1} parent=1 // pred_check
      _
    $region11: #{gru_cell.1} parent=1 // pred_check_branch
      %35 = sbr.rel (0) target = $region13
    $region12: #{gru_cell.1} parent=1 // pred_region
      %s37 = ssub.s32 3072, 3072
      %38 = vsyncadd [#allocation6], %s37
      %s39 = sshll.u32 [#allocation7], 4
      %s40 = int_to_ptr.vmem [resolvable:$true] %s39
      %45 = dma.hbm_to_vmem [thread:$0]  %s2, 3072, %s40, [#allocation6], 64, 64, 4
    $region13: #{gru_cell.1} parent=1 // pred_fallthru
      _
    // Predicated region
    $region14: #{gru_cell.1} parent=1 // pred_check
      _
    $region15: #{gru_cell.1} parent=1 // pred_check_branch
      %47 = sbr.rel (0) target = $region17
    $region16: #{gru_cell.1} parent=1 // pred_region
      %s49 = ssub.s32 3072, 3072
      %50 = vsyncadd [#allocation9], %s49
      %s51 = sshll.u32 [#allocation8], 4
      %s52 = int_to_ptr.vmem [resolvable:$true] %s51
      %57 = dma.hbm_to_vmem [thread:$0]  %s3, 3072, %s52, [#allocation9], 64, 64, 4
    $region17: #{gru_cell.1} parent=1 // pred_fallthru
      _
    // Predicated region
    $region18: #{gru_cell.1} parent=1 // pred_check
      _
    $region19: #{gru_cell.1} parent=1 // pred_check_branch
      %59 = sbr.rel (0) target = $region21
    $region20: #{gru_cell.1} parent=1 // pred_region
      %s61 = ssub.s32 48, 48
      %62 = vsyncadd [#allocation9], %s61
      %s63 = sshll.u32 [#allocation10], 4
      %s64 = int_to_ptr.vmem [resolvable:$true] %s63
      %69 = dma.hbm_to_vmem [thread:$0]  %s4, 48, %s64, [#allocation9], 16, 16, 1
    $region21: #{gru_cell.1} parent=1 // pred_fallthru
      _
    // Predicated region
    $region22: #{gru_cell.1} parent=1 // pred_check
      _
    $region23: #{gru_cell.1} parent=1 // pred_check_branch
      %71 = sbr.rel (0) target = $region25
    $region24: #{gru_cell.1} parent=1 // pred_region
      %72 = dma.done [#allocation3], 64
    $region25: #{gru_cell.1} parent=1 // pred_fallthru
      _
    // Predicated region
    $region26: #{gru_cell.1} parent=1 // pred_check
      _
    $region27: #{gru_cell.1} parent=1 // pred_check_branch
      %74 = sbr.rel (0) target = $region29
    $region28: #{gru_cell.1} parent=1 // pred_region
      %75 = dma.done [#allocation6], 128
    $region29: #{gru_cell.1} parent=1 // pred_fallthru
      _
    // Predicated region
    $region30: #{gru_cell.1} parent=1 // pred_check
      _
    $region31: #{gru_cell.1} parent=1 // pred_check_branch
      %77 = sbr.rel (0) target = $region33
    $region32: #{gru_cell.1} parent=1 // pred_region
      %78 = dma.done [#allocation6], 3072
    $region33: #{gru_cell.1} parent=1 // pred_fallthru
      _
    // Predicated region
    $region34: #{gru_cell.1} parent=1 // pred_check
      _
    $region35: #{gru_cell.1} parent=1 // pred_check_branch
      %80 = sbr.rel (0) target = $region37
    $region36: #{gru_cell.1} parent=1 // pred_region
      %81 = dma.done [#allocation9], 3072
    $region37: #{gru_cell.1} parent=1 // pred_fallthru
      _
    // Predicated region
    $region38: #{gru_cell.1} parent=1 // pred_check
      _
    $region39: #{gru_cell.1} parent=1 // pred_check_branch
      %83 = sbr.rel (0) target = $region41
    $region40: #{gru_cell.1} parent=1 // pred_region
      %84 = dma.done [#allocation9], 48
    $region41: #{gru_cell.1} parent=1 // pred_fallthru
      _
    %v86 = vld [vmem:[#allocation2] sm:$0xf]
    %v87 = vld [vmem:[#allocation5] sm:$0xff]
    %v88 = vpack.c.bf16 %v87, %v87
    %v89 = vld [vmem:[#allocation7] sm:$0xf]
    %v90 = vld [vmem:[#allocation7 + $0x4] sm:$0xf]
    %v91 = vld [vmem:[#allocation7 + $0x8] sm:$0xf]
    %v92 = vld [vmem:[#allocation7 + $0xc] sm:$0xf]
    %v93 = vld [vmem:[#allocation7 + $0x10] sm:$0xf]
    %v94 = vld [vmem:[#allocation7 + $0x14] sm:$0xf]
    %v95 = vld [vmem:[#allocation7 + $0x18] sm:$0xf]
    %v96 = vld [vmem:[#allocation7 + $0x1c] sm:$0xf]
    %v97 = vld [vmem:[#allocation7 + $0x20] sm:$0xf]
    %v98 = vld [vmem:[#allocation7 + $0x24] sm:$0xf]
    %v99 = vld [vmem:[#allocation7 + $0x28] sm:$0xf]
    %v100 = vld [vmem:[#allocation7 + $0x2c] sm:$0xf]
    %v101 = vld [vmem:[#allocation7 + $0x30] sm:$0xf]
    %v102 = vld [vmem:[#allocation7 + $0x34] sm:$0xf]
    %v103 = vld [vmem:[#allocation7 + $0x38] sm:$0xf]
    %v104 = vld [vmem:[#allocation7 + $0x3c] sm:$0xf]
    %v105 = vld [vmem:[#allocation8] sm:$0xf]
    %v106 = vld [vmem:[#allocation8 + $0x4] sm:$0xf]
    %v107 = vld [vmem:[#allocation8 + $0x8] sm:$0xf]
    %v108 = vld [vmem:[#allocation8 + $0xc] sm:$0xf]
    %v109 = vld [vmem:[#allocation8 + $0x10] sm:$0xf]
    %v110 = vld [vmem:[#allocation8 + $0x14] sm:$0xf]
    %v111 = vld [vmem:[#allocation8 + $0x18] sm:$0xf]
    %v112 = vld [vmem:[#allocation8 + $0x1c] sm:$0xf]
    %v113 = vld [vmem:[#allocation8 + $0x20] sm:$0xf]
    %v114 = vld [vmem:[#allocation8 + $0x24] sm:$0xf]
    %v115 = vld [vmem:[#allocation8 + $0x28] sm:$0xf]
    %v116 = vld [vmem:[#allocation8 + $0x2c] sm:$0xf]
    %v117 = vld [vmem:[#allocation8 + $0x30] sm:$0xf]
    %v118 = vld [vmem:[#allocation8 + $0x34] sm:$0xf]
    %v119 = vld [vmem:[#allocation8 + $0x38] sm:$0xf]
    %v120 = vld [vmem:[#allocation8 + $0x3c] sm:$0xf]
    %v137 = vunpack.c.l.b16 %v105
    %v138 = vunpack.c.l.b16 %v106
    %v139 = vunpack.c.l.b16 %v107
    %v140 = vunpack.c.l.b16 %v108
    %v141 = vunpack.c.l.b16 %v109
    %v142 = vunpack.c.l.b16 %v110
    %v143 = vunpack.c.l.b16 %v111
    %v144 = vunpack.c.l.b16 %v112
    %v145 = vunpack.c.l.b16 %v113
    %v146 = vunpack.c.l.b16 %v114
    %v147 = vunpack.c.l.b16 %v115
    %v148 = vunpack.c.l.b16 %v116
    %v149 = vunpack.c.l.b16 %v117
    %v150 = vunpack.c.l.b16 %v118
    %v151 = vunpack.c.l.b16 %v119
    %v152 = vunpack.c.l.b16 %v120
    %v153 = vpack.c.b16 %v138, %v137
    %v154 = vpack.c.b16 %v140, %v139
    %v155 = vpack.c.b16 %v142, %v141
    %v156 = vpack.c.b16 %v144, %v143
    %v157 = vpack.c.b16 %v146, %v145
    %v158 = vpack.c.b16 %v148, %v147
    %v159 = vpack.c.b16 %v150, %v149
    %v160 = vpack.c.b16 %v152, %v151
    %169 = vmatprep.subr.bf16.mxu0 0
    %170 = vmatpush1.bf16.msra.mxu0 %v153
    %171 = vmatprep.subr.bf16.mxu0 0
    %172 = vmatpush1.bf16.msra.mxu0 %v154
    %173 = vmatprep.subr.bf16.mxu0 0
    %174 = vmatpush1.bf16.msra.mxu0 %v155
    %175 = vmatprep.subr.bf16.mxu0 0
    %176 = vmatpush1.bf16.msra.mxu0 %v156
    %177 = vmatprep.subr.bf16.mxu0 0
    %178 = vmatpush1.bf16.msra.mxu0 %v157
    %179 = vmatprep.subr.bf16.mxu0 0
    %180 = vmatpush1.bf16.msra.mxu0 %v158
    %181 = vmatprep.subr.bf16.mxu0 0
    %182 = vmatpush1.bf16.msra.mxu0 %v159
    %183 = vmatprep.subr.bf16.mxu0 0
    %184 = vmatpush1.bf16.msra.mxu0 %v160
    %185 = vmatprep.subr.bf16.mxu0 0
    %186 = vmatpush1.bf16.msra.mxu0 0
    %187 = vmatprep.subr.bf16.mxu0 0
    %188 = vmatpush1.bf16.msra.mxu0 0
    %189 = vmatprep.subr.bf16.mxu0 0
    %190 = vmatpush1.bf16.msra.mxu0 0
    %191 = vmatprep.subr.bf16.mxu0 0
    %192 = vmatpush1.bf16.msra.mxu0 0
    %193 = vmatprep.subr.bf16.mxu0 0
    %194 = vmatpush1.bf16.msra.mxu0 0
    %195 = vmatprep.subr.bf16.mxu0 0
    %196 = vmatpush1.bf16.msra.mxu0 0
    %197 = vmatprep.subr.bf16.mxu0 0
    %198 = vmatpush1.bf16.msra.mxu0 0
    %199 = vmatprep.subr.bf16.mxu0 0
    %200 = vmatpush1.bf16.msra.mxu0 0
    %201 = vmatprep.mubr.bf16.mxu0 0
    %202 = vmatmul.mubr.bf16.gmra.mrb[0].mxu0 %v88
    %v203 = vpop.f32.mrb[0].mxu0
    %v204 = vadd.f32 0.0, %v203
    %v205 = vpop.f32.mrb[0].mxu0
    %v206 = vpop.f32.mrb[0].mxu0
    %v207 = vpop.f32.mrb[0].mxu0
    %208 = vdwg.mxu0
    %v225 = vunpack.c.l.b16 %v89
    %v226 = vunpack.c.l.b16 %v90
    %v227 = vunpack.c.l.b16 %v91
    %v228 = vunpack.c.l.b16 %v92
    %v229 = vunpack.c.l.b16 %v93
    %v230 = vunpack.c.l.b16 %v94
    %v231 = vunpack.c.l.b16 %v95
    %v232 = vunpack.c.l.b16 %v96
    %v233 = vunpack.c.l.b16 %v97
    %v234 = vunpack.c.l.b16 %v98
    %v235 = vunpack.c.l.b16 %v99
    %v236 = vunpack.c.l.b16 %v100
    %v237 = vunpack.c.l.b16 %v101
    %v238 = vunpack.c.l.b16 %v102
    %v239 = vunpack.c.l.b16 %v103
    %v240 = vunpack.c.l.b16 %v104
    %v241 = vpack.c.b16 %v226, %v225
    %v242 = vpack.c.b16 %v228, %v227
    %v243 = vpack.c.b16 %v230, %v229
    %v244 = vpack.c.b16 %v232, %v231
    %v245 = vpack.c.b16 %v234, %v233
    %v246 = vpack.c.b16 %v236, %v235
    %v247 = vpack.c.b16 %v238, %v237
    %v248 = vpack.c.b16 %v240, %v239
    %257 = vmatprep.subr.bf16.mxu0 0
    %258 = vmatpush1.bf16.msra.mxu0 %v241
    %259 = vmatprep.subr.bf16.mxu0 0
    %260 = vmatpush1.bf16.msra.mxu0 %v242
    %261 = vmatprep.subr.bf16.mxu0 0
    %262 = vmatpush1.bf16.msra.mxu0 %v243
    %263 = vmatprep.subr.bf16.mxu0 0
    %264 = vmatpush1.bf16.msra.mxu0 %v244
    %265 = vmatprep.subr.bf16.mxu0 0
    %266 = vmatpush1.bf16.msra.mxu0 %v245
    %267 = vmatprep.subr.bf16.mxu0 0
    %268 = vmatpush1.bf16.msra.mxu0 %v246
    %269 = vmatprep.subr.bf16.mxu0 0
    %270 = vmatpush1.bf16.msra.mxu0 %v247
    %271 = vmatprep.subr.bf16.mxu0 0
    %272 = vmatpush1.bf16.msra.mxu0 %v248
    %273 = vmatprep.subr.bf16.mxu0 0
    %274 = vmatpush1.bf16.msra.mxu0 0
    %275 = vmatprep.subr.bf16.mxu0 0
    %276 = vmatpush1.bf16.msra.mxu0 0
    %277 = vmatprep.subr.bf16.mxu0 0
    %278 = vmatpush1.bf16.msra.mxu0 0
    %279 = vmatprep.subr.bf16.mxu0 0
    %280 = vmatpush1.bf16.msra.mxu0 0
    %281 = vmatprep.subr.bf16.mxu0 0
    %282 = vmatpush1.bf16.msra.mxu0 0
    %283 = vmatprep.subr.bf16.mxu0 0
    %284 = vmatpush1.bf16.msra.mxu0 0
    %285 = vmatprep.subr.bf16.mxu0 0
    %286 = vmatpush1.bf16.msra.mxu0 0
    %287 = vmatprep.subr.bf16.mxu0 0
    %288 = vmatpush1.bf16.msra.mxu0 0
    %289 = vmatprep.mubr.bf16.mxu0 0
    %290 = vmatmul.mubr.bf16.gmra.mrb[0].mxu0 %v86
    %v291 = vpop.f32.mrb[0].mxu0
    %v292 = vadd.f32 %v204, %v291
    %v293 = vpop.f32.mrb[0].mxu0
    %v294 = vpop.f32.mrb[0].mxu0
    %v295 = vpop.f32.mrb[0].mxu0
    %296 = vdwg.mxu0
    %v297 = vld [vmem:[#allocation10] sm:$0x1]
    %v299 = vlaneseq
    %v300 = vshrl.u32 %v299, 7
    %v301 = vsub.s32 0, %v300
    %v302 = vrot.slane %v297, %v301
    %v304 = vadd.f32 %v292, %v302
    %v305 = vxor.u32 %v304, 2147483648
    %v306 = vmul.f32 %v305, 1.442695
    %v307 = vpow.pop %v306
    %v308 = vadd.f32 %v307, 1.0
    %v309 = vrcp.pop %v308
    %v310 = vmul.f32 1.0, %v309
    %s311 = scalar_lea.vmem [#allocation7], 64
    %v312 = vld [vmem:[%s311] sm:$0xf]
    %v313 = vld [vmem:[%s311 + $0x4] sm:$0xf]
    %v314 = vld [vmem:[%s311 + $0x8] sm:$0xf]
    %v315 = vld [vmem:[%s311 + $0xc] sm:$0xf]
    %v316 = vld [vmem:[%s311 + $0x10] sm:$0xf]
    %v317 = vld [vmem:[%s311 + $0x14] sm:$0xf]
    %v318 = vld [vmem:[%s311 + $0x18] sm:$0xf]
    %v319 = vld [vmem:[%s311 + $0x1c] sm:$0xf]
    %v320 = vld [vmem:[%s311 + $0x20] sm:$0xf]
    %v321 = vld [vmem:[%s311 + $0x24] sm:$0xf]
    %v322 = vld [vmem:[%s311 + $0x28] sm:$0xf]
    %v323 = vld [vmem:[%s311 + $0x2c] sm:$0xf]
    %v324 = vld [vmem:[%s311 + $0x30] sm:$0xf]
    %v325 = vld [vmem:[%s311 + $0x34] sm:$0xf]
    %v326 = vld [vmem:[%s311 + $0x38] sm:$0xf]
    %v327 = vld [vmem:[%s311 + $0x3c] sm:$0xf]
    %s328 = scalar_lea.vmem [#allocation8], 64
    %v329 = vld [vmem:[%s328] sm:$0xf]
    %v330 = vld [vmem:[%s328 + $0x4] sm:$0xf]
    %v331 = vld [vmem:[%s328 + $0x8] sm:$0xf]
    %v332 = vld [vmem:[%s328 + $0xc] sm:$0xf]
    %v333 = vld [vmem:[%s328 + $0x10] sm:$0xf]
    %v334 = vld [vmem:[%s328 + $0x14] sm:$0xf]
    %v335 = vld [vmem:[%s328 + $0x18] sm:$0xf]
    %v336 = vld [vmem:[%s328 + $0x1c] sm:$0xf]
    %v337 = vld [vmem:[%s328 + $0x20] sm:$0xf]
    %v338 = vld [vmem:[%s328 + $0x24] sm:$0xf]
    %v339 = vld [vmem:[%s328 + $0x28] sm:$0xf]
    %v340 = vld [vmem:[%s328 + $0x2c] sm:$0xf]
    %v341 = vld [vmem:[%s328 + $0x30] sm:$0xf]
    %v342 = vld [vmem:[%s328 + $0x34] sm:$0xf]
    %v343 = vld [vmem:[%s328 + $0x38] sm:$0xf]
    %v344 = vld [vmem:[%s328 + $0x3c] sm:$0xf]
    %v361 = vunpack.c.l.b16 %v329
    %v362 = vunpack.c.l.b16 %v330
    %v363 = vunpack.c.l.b16 %v331
    %v364 = vunpack.c.l.b16 %v332
    %v365 = vunpack.c.l.b16 %v333
    %v366 = vunpack.c.l.b16 %v334
    %v367 = vunpack.c.l.b16 %v335
    %v368 = vunpack.c.l.b16 %v336
    %v369 = vunpack.c.l.b16 %v337
    %v370 = vunpack.c.l.b16 %v338
    %v371 = vunpack.c.l.b16 %v339
    %v372 = vunpack.c.l.b16 %v340
    %v373 = vunpack.c.l.b16 %v341
    %v374 = vunpack.c.l.b16 %v342
    %v375 = vunpack.c.l.b16 %v343
    %v376 = vunpack.c.l.b16 %v344
    %v377 = vpack.c.b16 %v362, %v361
    %v378 = vpack.c.b16 %v364, %v363
    %v379 = vpack.c.b16 %v366, %v365
    %v380 = vpack.c.b16 %v368, %v367
    %v381 = vpack.c.b16 %v370, %v369
    %v382 = vpack.c.b16 %v372, %v371
    %v383 = vpack.c.b16 %v374, %v373
    %v384 = vpack.c.b16 %v376, %v375
    %393 = vmatprep.subr.bf16.mxu0 0
    %394 = vmatpush1.bf16.msra.mxu0 %v377
    %395 = vmatprep.subr.bf16.mxu0 0
    %396 = vmatpush1.bf16.msra.mxu0 %v378
    %397 = vmatprep.subr.bf16.mxu0 0
    %398 = vmatpush1.bf16.msra.mxu0 %v379
    %399 = vmatprep.subr.bf16.mxu0 0
    %400 = vmatpush1.bf16.msra.mxu0 %v380
    %401 = vmatprep.subr.bf16.mxu0 0
    %402 = vmatpush1.bf16.msra.mxu0 %v381
    %403 = vmatprep.subr.bf16.mxu0 0
    %404 = vmatpush1.bf16.msra.mxu0 %v382
    %405 = vmatprep.subr.bf16.mxu0 0
    %406 = vmatpush1.bf16.msra.mxu0 %v383
    %407 = vmatprep.subr.bf16.mxu0 0
    %408 = vmatpush1.bf16.msra.mxu0 %v384
    %409 = vmatprep.subr.bf16.mxu0 0
    %410 = vmatpush1.bf16.msra.mxu0 0
    %411 = vmatprep.subr.bf16.mxu0 0
    %412 = vmatpush1.bf16.msra.mxu0 0
    %413 = vmatprep.subr.bf16.mxu0 0
    %414 = vmatpush1.bf16.msra.mxu0 0
    %415 = vmatprep.subr.bf16.mxu0 0
    %416 = vmatpush1.bf16.msra.mxu0 0
    %417 = vmatprep.subr.bf16.mxu0 0
    %418 = vmatpush1.bf16.msra.mxu0 0
    %419 = vmatprep.subr.bf16.mxu0 0
    %420 = vmatpush1.bf16.msra.mxu0 0
    %421 = vmatprep.subr.bf16.mxu0 0
    %422 = vmatpush1.bf16.msra.mxu0 0
    %423 = vmatprep.subr.bf16.mxu0 0
    %424 = vmatpush1.bf16.msra.mxu0 0
    %425 = vmatprep.mubr.bf16.mxu0 0
    %426 = vmatmul.mubr.bf16.gmra.mrb[0].mxu0 %v88
    %v427 = vpop.f32.mrb[0].mxu0
    %v428 = vadd.f32 0.0, %v427
    %v429 = vpop.f32.mrb[0].mxu0
    %v430 = vpop.f32.mrb[0].mxu0
    %v431 = vpop.f32.mrb[0].mxu0
    %432 = vdwg.mxu0
    %v449 = vunpack.c.l.b16 %v312
    %v450 = vunpack.c.l.b16 %v313
    %v451 = vunpack.c.l.b16 %v314
    %v452 = vunpack.c.l.b16 %v315
    %v453 = vunpack.c.l.b16 %v316
    %v454 = vunpack.c.l.b16 %v317
    %v455 = vunpack.c.l.b16 %v318
    %v456 = vunpack.c.l.b16 %v319
    %v457 = vunpack.c.l.b16 %v320
    %v458 = vunpack.c.l.b16 %v321
    %v459 = vunpack.c.l.b16 %v322
    %v460 = vunpack.c.l.b16 %v323
    %v461 = vunpack.c.l.b16 %v324
    %v462 = vunpack.c.l.b16 %v325
    %v463 = vunpack.c.l.b16 %v326
    %v464 = vunpack.c.l.b16 %v327
    %v465 = vpack.c.b16 %v450, %v449
    %v466 = vpack.c.b16 %v452, %v451
    %v467 = vpack.c.b16 %v454, %v453
    %v468 = vpack.c.b16 %v456, %v455
    %v469 = vpack.c.b16 %v458, %v457
    %v470 = vpack.c.b16 %v460, %v459
    %v471 = vpack.c.b16 %v462, %v461
    %v472 = vpack.c.b16 %v464, %v463
    %481 = vmatprep.subr.bf16.mxu0 0
    %482 = vmatpush1.bf16.msra.mxu0 %v465
    %483 = vmatprep.subr.bf16.mxu0 0
    %484 = vmatpush1.bf16.msra.mxu0 %v466
    %485 = vmatprep.subr.bf16.mxu0 0
    %486 = vmatpush1.bf16.msra.mxu0 %v467
    %487 = vmatprep.subr.bf16.mxu0 0
    %488 = vmatpush1.bf16.msra.mxu0 %v468
    %489 = vmatprep.subr.bf16.mxu0 0
    %490 = vmatpush1.bf16.msra.mxu0 %v469
    %491 = vmatprep.subr.bf16.mxu0 0
    %492 = vmatpush1.bf16.msra.mxu0 %v470
    %493 = vmatprep.subr.bf16.mxu0 0
    %494 = vmatpush1.bf16.msra.mxu0 %v471
    %495 = vmatprep.subr.bf16.mxu0 0
    %496 = vmatpush1.bf16.msra.mxu0 %v472
    %497 = vmatprep.subr.bf16.mxu0 0
    %498 = vmatpush1.bf16.msra.mxu0 0
    %499 = vmatprep.subr.bf16.mxu0 0
    %500 = vmatpush1.bf16.msra.mxu0 0
    %501 = vmatprep.subr.bf16.mxu0 0
    %502 = vmatpush1.bf16.msra.mxu0 0
    %503 = vmatprep.subr.bf16.mxu0 0
    %504 = vmatpush1.bf16.msra.mxu0 0
    %505 = vmatprep.subr.bf16.mxu0 0
    %506 = vmatpush1.bf16.msra.mxu0 0
    %507 = vmatprep.subr.bf16.mxu0 0
    %508 = vmatpush1.bf16.msra.mxu0 0
    %509 = vmatprep.subr.bf16.mxu0 0
    %510 = vmatpush1.bf16.msra.mxu0 0
    %511 = vmatprep.subr.bf16.mxu0 0
    %512 = vmatpush1.bf16.msra.mxu0 0
    %513 = vmatprep.mubr.bf16.mxu0 0
    %514 = vmatmul.mubr.bf16.gmra.mrb[0].mxu0 %v86
    %v515 = vpop.f32.mrb[0].mxu0
    %v516 = vadd.f32 %v428, %v515
    %v517 = vpop.f32.mrb[0].mxu0
    %v518 = vpop.f32.mrb[0].mxu0
    %v519 = vpop.f32.mrb[0].mxu0
    %520 = vdwg.mxu0
    %s521 = scalar_lea.vmem [#allocation10], 1
    %v522 = vld [vmem:[%s521] sm:$0x1]
    %v524 = vlaneseq
    %v525 = vshrl.u32 %v524, 7
    %v526 = vsub.s32 0, %v525
    %v527 = vrot.slane %v522, %v526
    %v529 = vadd.f32 %v516, %v527
    %v530 = vmul.f32 %v310, %v529
    %v531 = vtanh.pop %v530
    %s532 = scalar_lea.vmem [#allocation7], 128
    %v533 = vld [vmem:[%s532] sm:$0xf]
    %v534 = vld [vmem:[%s532 + $0x4] sm:$0xf]
    %v535 = vld [vmem:[%s532 + $0x8] sm:$0xf]
    %v536 = vld [vmem:[%s532 + $0xc] sm:$0xf]
    %v537 = vld [vmem:[%s532 + $0x10] sm:$0xf]
    %v538 = vld [vmem:[%s532 + $0x14] sm:$0xf]
    %v539 = vld [vmem:[%s532 + $0x18] sm:$0xf]
    %v540 = vld [vmem:[%s532 + $0x1c] sm:$0xf]
    %v541 = vld [vmem:[%s532 + $0x20] sm:$0xf]
    %v542 = vld [vmem:[%s532 + $0x24] sm:$0xf]
    %v543 = vld [vmem:[%s532 + $0x28] sm:$0xf]
    %v544 = vld [vmem:[%s532 + $0x2c] sm:$0xf]
    %v545 = vld [vmem:[%s532 + $0x30] sm:$0xf]
    %v546 = vld [vmem:[%s532 + $0x34] sm:$0xf]
    %v547 = vld [vmem:[%s532 + $0x38] sm:$0xf]
    %v548 = vld [vmem:[%s532 + $0x3c] sm:$0xf]
    %s549 = scalar_lea.vmem [#allocation8], 128
    %v550 = vld [vmem:[%s549] sm:$0xf]
    %v551 = vld [vmem:[%s549 + $0x4] sm:$0xf]
    %v552 = vld [vmem:[%s549 + $0x8] sm:$0xf]
    %v553 = vld [vmem:[%s549 + $0xc] sm:$0xf]
    %v554 = vld [vmem:[%s549 + $0x10] sm:$0xf]
    %v555 = vld [vmem:[%s549 + $0x14] sm:$0xf]
    %v556 = vld [vmem:[%s549 + $0x18] sm:$0xf]
    %v557 = vld [vmem:[%s549 + $0x1c] sm:$0xf]
    %v558 = vld [vmem:[%s549 + $0x20] sm:$0xf]
    %v559 = vld [vmem:[%s549 + $0x24] sm:$0xf]
    %v560 = vld [vmem:[%s549 + $0x28] sm:$0xf]
    %v561 = vld [vmem:[%s549 + $0x2c] sm:$0xf]
    %v562 = vld [vmem:[%s549 + $0x30] sm:$0xf]
    %v563 = vld [vmem:[%s549 + $0x34] sm:$0xf]
    %v564 = vld [vmem:[%s549 + $0x38] sm:$0xf]
    %v565 = vld [vmem:[%s549 + $0x3c] sm:$0xf]
    %v582 = vunpack.c.l.b16 %v550
    %v583 = vunpack.c.l.b16 %v551
    %v584 = vunpack.c.l.b16 %v552
    %v585 = vunpack.c.l.b16 %v553
    %v586 = vunpack.c.l.b16 %v554
    %v587 = vunpack.c.l.b16 %v555
    %v588 = vunpack.c.l.b16 %v556
    %v589 = vunpack.c.l.b16 %v557
    %v590 = vunpack.c.l.b16 %v558
    %v591 = vunpack.c.l.b16 %v559
    %v592 = vunpack.c.l.b16 %v560
    %v593 = vunpack.c.l.b16 %v561
    %v594 = vunpack.c.l.b16 %v562
    %v595 = vunpack.c.l.b16 %v563
    %v596 = vunpack.c.l.b16 %v564
    %v597 = vunpack.c.l.b16 %v565
    %v598 = vpack.c.b16 %v583, %v582
    %v599 = vpack.c.b16 %v585, %v584
    %v600 = vpack.c.b16 %v587, %v586
    %v601 = vpack.c.b16 %v589, %v588
    %v602 = vpack.c.b16 %v591, %v590
    %v603 = vpack.c.b16 %v593, %v592
    %v604 = vpack.c.b16 %v595, %v594
    %v605 = vpack.c.b16 %v597, %v596
    %614 = vmatprep.subr.bf16.mxu0 0
    %615 = vmatpush1.bf16.msra.mxu0 %v598
    %616 = vmatprep.subr.bf16.mxu0 0
    %617 = vmatpush1.bf16.msra.mxu0 %v599
    %618 = vmatprep.subr.bf16.mxu0 0
    %619 = vmatpush1.bf16.msra.mxu0 %v600
    %620 = vmatprep.subr.bf16.mxu0 0
    %621 = vmatpush1.bf16.msra.mxu0 %v601
    %622 = vmatprep.subr.bf16.mxu0 0
    %623 = vmatpush1.bf16.msra.mxu0 %v602
    %624 = vmatprep.subr.bf16.mxu0 0
    %625 = vmatpush1.bf16.msra.mxu0 %v603
    %626 = vmatprep.subr.bf16.mxu0 0
    %627 = vmatpush1.bf16.msra.mxu0 %v604
    %628 = vmatprep.subr.bf16.mxu0 0
    %629 = vmatpush1.bf16.msra.mxu0 %v605
    %630 = vmatprep.subr.bf16.mxu0 0
    %631 = vmatpush1.bf16.msra.mxu0 0
    %632 = vmatprep.subr.bf16.mxu0 0
    %633 = vmatpush1.bf16.msra.mxu0 0
    %634 = vmatprep.subr.bf16.mxu0 0
    %635 = vmatpush1.bf16.msra.mxu0 0
    %636 = vmatprep.subr.bf16.mxu0 0
    %637 = vmatpush1.bf16.msra.mxu0 0
    %638 = vmatprep.subr.bf16.mxu0 0
    %639 = vmatpush1.bf16.msra.mxu0 0
    %640 = vmatprep.subr.bf16.mxu0 0
    %641 = vmatpush1.bf16.msra.mxu0 0
    %642 = vmatprep.subr.bf16.mxu0 0
    %643 = vmatpush1.bf16.msra.mxu0 0
    %644 = vmatprep.subr.bf16.mxu0 0
    %645 = vmatpush1.bf16.msra.mxu0 0
    %646 = vmatprep.mubr.bf16.mxu0 0
    %647 = vmatmul.mubr.bf16.gmra.mrb[0].mxu0 %v88
    %v648 = vpop.f32.mrb[0].mxu0
    %v649 = vadd.f32 0.0, %v648
    %v650 = vpop.f32.mrb[0].mxu0
    %v651 = vpop.f32.mrb[0].mxu0
    %v652 = vpop.f32.mrb[0].mxu0
    %653 = vdwg.mxu0
    %v670 = vunpack.c.l.b16 %v533
    %v671 = vunpack.c.l.b16 %v534
    %v672 = vunpack.c.l.b16 %v535
    %v673 = vunpack.c.l.b16 %v536
    %v674 = vunpack.c.l.b16 %v537
    %v675 = vunpack.c.l.b16 %v538
    %v676 = vunpack.c.l.b16 %v539
    %v677 = vunpack.c.l.b16 %v540
    %v678 = vunpack.c.l.b16 %v541
    %v679 = vunpack.c.l.b16 %v542
    %v680 = vunpack.c.l.b16 %v543
    %v681 = vunpack.c.l.b16 %v544
    %v682 = vunpack.c.l.b16 %v545
    %v683 = vunpack.c.l.b16 %v546
    %v684 = vunpack.c.l.b16 %v547
    %v685 = vunpack.c.l.b16 %v548
    %v686 = vpack.c.b16 %v671, %v670
    %v687 = vpack.c.b16 %v673, %v672
    %v688 = vpack.c.b16 %v675, %v674
    %v689 = vpack.c.b16 %v677, %v676
    %v690 = vpack.c.b16 %v679, %v678
    %v691 = vpack.c.b16 %v681, %v680
    %v692 = vpack.c.b16 %v683, %v682
    %v693 = vpack.c.b16 %v685, %v684
    %702 = vmatprep.subr.bf16.mxu0 0
    %703 = vmatpush1.bf16.msra.mxu0 %v686
    %704 = vmatprep.subr.bf16.mxu0 0
    %705 = vmatpush1.bf16.msra.mxu0 %v687
    %706 = vmatprep.subr.bf16.mxu0 0
    %707 = vmatpush1.bf16.msra.mxu0 %v688
    %708 = vmatprep.subr.bf16.mxu0 0
    %709 = vmatpush1.bf16.msra.mxu0 %v689
    %710 = vmatprep.subr.bf16.mxu0 0
    %711 = vmatpush1.bf16.msra.mxu0 %v690
    %712 = vmatprep.subr.bf16.mxu0 0
    %713 = vmatpush1.bf16.msra.mxu0 %v691
    %714 = vmatprep.subr.bf16.mxu0 0
    %715 = vmatpush1.bf16.msra.mxu0 %v692
    %716 = vmatprep.subr.bf16.mxu0 0
    %717 = vmatpush1.bf16.msra.mxu0 %v693
    %718 = vmatprep.subr.bf16.mxu0 0
    %719 = vmatpush1.bf16.msra.mxu0 0
    %720 = vmatprep.subr.bf16.mxu0 0
    %721 = vmatpush1.bf16.msra.mxu0 0
    %722 = vmatprep.subr.bf16.mxu0 0
    %723 = vmatpush1.bf16.msra.mxu0 0
    %724 = vmatprep.subr.bf16.mxu0 0
    %725 = vmatpush1.bf16.msra.mxu0 0
    %726 = vmatprep.subr.bf16.mxu0 0
    %727 = vmatpush1.bf16.msra.mxu0 0
    %728 = vmatprep.subr.bf16.mxu0 0
    %729 = vmatpush1.bf16.msra.mxu0 0
    %730 = vmatprep.subr.bf16.mxu0 0
    %731 = vmatpush1.bf16.msra.mxu0 0
    %732 = vmatprep.subr.bf16.mxu0 0
    %733 = vmatpush1.bf16.msra.mxu0 0
    %734 = vmatprep.mubr.bf16.mxu0 0
    %735 = vmatmul.mubr.bf16.gmra.mrb[0].mxu0 %v86
    %v736 = vpop.f32.mrb[0].mxu0
    %v737 = vadd.f32 %v649, %v736
    %v738 = vpop.f32.mrb[0].mxu0
    %v739 = vpop.f32.mrb[0].mxu0
    %v740 = vpop.f32.mrb[0].mxu0
    %741 = vdwg.mxu0
    %s742 = scalar_lea.vmem [#allocation10], 2
    %v743 = vld [vmem:[%s742] sm:$0x1]
    %v745 = vlaneseq
    %v746 = vshrl.u32 %v745, 7
    %v747 = vsub.s32 0, %v746
    %v748 = vrot.slane %v743, %v747
    %v750 = vadd.f32 %v737, %v748
    %v751 = vxor.u32 %v750, 2147483648
    %v752 = vmul.f32 %v751, 1.442695
    %v753 = vpow.pop %v752
    %v754 = vadd.f32 %v753, 1.0
    %v755 = vrcp.pop %v754
    %v756 = vmul.f32 1.0, %v755
    %s757 = smul.u32 0, 128
    %s758 = sshra.s32 %s757, 7
    %s759 = sand.u32 %s757, 127
    %s760 = scalar_lea.vmem [#allocation5], %s758
    %v761 = vld [vmem:[%s760] sm:$0xff]
    %v762 = vmul.f32 %v756, %v531
    %v763 = vsub.f32 1.0, %v756
    %v764 = vmul.f32 %v763, %v761
    %v765 = vadd.f32 %v762, %v764
    %766 = vst [vmem:[#allocation11] sm:$0xff] %v765
    // Predicated region
    $region42: #{gru_cell.1} parent=1 // pred_check
      _
    $region43: #{gru_cell.1} parent=1 // pred_check_branch
      %768 = sbr.rel (0) target = $region45
    $region44: #{gru_cell.1} parent=1 // pred_region
      %s770 = ssub.s32 128, 128
      %771 = vsyncadd [#allocation4], %s770
      %s773 = sshll.u32 [#allocation11], 4
      %s774 = int_to_ptr.vmem [resolvable:$true] %s773
      %776 = dma.vmem_to_hbm [thread:$0]  %s774, 128, %s5, [#allocation4]
    $region45: #{gru_cell.1} parent=1 // pred_fallthru
      _
    // Predicated region
    $region46: #{gru_cell.1} parent=1 // pred_check
      _
    $region47: #{gru_cell.1} parent=1 // pred_check_branch
      %778 = sbr.rel (0) target = $region49
    $region48: #{gru_cell.1} parent=1 // pred_region
      %779 = dma.done [#allocation4], 128
    $region49: #{gru_cell.1} parent=1 // pred_fallthru
      _
    %780 = vsyncpa [#allocation3], 1
    %781 = vsyncpa [#allocation6], 1
    %782 = vsyncpa [#allocation9], 1
    %783 = vsyncpa [#allocation4], 1

</llo_original>
